<compile_context>
chip_gen: v5e
topology: v5e:2x2
jax: 0.10.0
libtpu: 0.0.40
codegen_flags: <defaults>
</compile_context>

<pallas_src>
import functools

import jax
import jax.numpy as jnp
from jax.experimental import pallas as pl
from jax.experimental.pallas import tpu as pltpu

HIDDEN = 64        # logical hidden width (matches the PyTorch module)
HIDDEN_PAD = 128   # zero-padded hidden width -> full 128-lane vregs


def _round_up(n, m):
    return ((n + m - 1) // m) * m


def quantile_net_kernel(x_ref, w1_ref, b1_ref, w2_ref, b2_ref, w3_ref, b3_ref,
                        o_ref):
    # fc1: bf16 MXU matmul, f32 accumulate; bias + ReLU in f32.
    h1 = jnp.dot(x_ref[...], w1_ref[...], preferred_element_type=jnp.float32)
    h1 = jnp.maximum(h1 + b1_ref[...], 0.0)                      # (TB, 128) f32
    # fc2: bf16 MXU matmul, f32 accumulate.
    h2 = jnp.dot(h1.astype(jnp.bfloat16), w2_ref[...],
                 preferred_element_type=jnp.float32)
    h2 = jnp.maximum(h2 + b2_ref[...], 0.0)                      # (TB, 128) f32
    # fc3 (N=1): VPU multiply + XLU row-reduce instead of an N=1 MXU matmul.
    # Padded lanes (64..127) are zero in h2 and w3, so they don't contribute.
    out = jnp.sum(h2 * w3_ref[...], axis=-1, keepdims=True) + b3_ref[...]  # (TB, 1)
    # Lane-dense, unmasked store: broadcast the column across all 128 lanes;
    # the wrapper keeps column 0 only.
    o_ref[...] = jnp.broadcast_to(out, o_ref.shape).astype(o_ref.dtype)


@functools.partial(jax.jit, static_argnames=("block_batch",))
def quantile_net_forward(x, kernel_params, *, block_batch=256):
    """x: (B, input_size) f32.  kernel_params: output of prepare_kernel_params."""
    w1, b1, w2, b2, w3, b3 = kernel_params
    B, D = x.shape

    # Batch tile: multiple of 8, capped so tiny batches stay a single block.
    # Footprint (double-buffered x + out tiles + resident weights) is well
    # under the 32 MiB scoped-VMEM default on v5e/v6e/v7x for TB <= 1024.
    TB = min(block_batch, _round_up(B, 8))
    Bp = _round_up(B, TB)

    xb = x.astype(jnp.bfloat16)          # bf16 halves streamed HBM traffic
    if Bp != B:
        xb = jnp.pad(xb, ((0, Bp - B), (0, 0)))   # zero rows; sliced off below

    def const(a):  # weight/bias blocks: whole array, VMEM-resident across steps
        return pl.BlockSpec(a.shape, lambda i: (0,) * a.ndim,
                            memory_space=pltpu.VMEM)

    out = pl.pallas_call(
        quantile_net_kernel,
        out_shape=jax.ShapeDtypeStruct((Bp, HIDDEN_PAD), jnp.float32),
        grid=(Bp // TB,),
        in_specs=[
            pl.BlockSpec((TB, D), lambda i: (i, 0), memory_space=pltpu.VMEM),
            const(w1), const(b1), const(w2), const(b2), const(w3), const(b3),
        ],
        out_specs=pl.BlockSpec((TB, HIDDEN_PAD), lambda i: (i, 0),
                               memory_space=pltpu.VMEM),
        compiler_params=pltpu.CompilerParams(
            dimension_semantics=("parallel",)),   # v7x: shard batch over 2 TCs
    )(xb, w1, b1, w2, b2, w3, b3)

    return out[:B, :1]


def init_params(key, input_size):
    """Deterministic PyTorch-like init; weights stored (in, out) == W.T."""
    ks = jax.random.split(key, 6)

    def lin(kw, kb, fan_in, fan_out):
        bound = 1.0 / jnp.sqrt(fan_in)
        w = jax.random.uniform(kw, (fan_in, fan_out), jnp.float32, -bound, bound)
        b = jax.random.uniform(kb, (1, fan_out), jnp.float32, -bound, bound)
        return w, b

    w1, b1 = lin(ks[0], ks[1], input_size, HIDDEN)
    w2, b2 = lin(ks[2], ks[3], HIDDEN, HIDDEN)
    w3, b3 = lin(ks[4], ks[5], HIDDEN, 1)
    return (w1, b1, w2, b2, w3, b3)


def prepare_kernel_params(params):
    """Zero-pad hidden 64 -> 128 and cast MXU operands (w1, w2) to bf16."""
    w1, b1, w2, b2, w3, b3 = params
    pad = HIDDEN_PAD - HIDDEN
    w1p = jnp.pad(w1, ((0, 0), (0, pad))).astype(jnp.bfloat16)    # (D, 128)
    b1p = jnp.pad(b1, ((0, 0), (0, pad)))                          # (1, 128) f32
    w2p = jnp.pad(w2, ((0, pad), (0, pad))).astype(jnp.bfloat16)   # (128, 128)
    b2p = jnp.pad(b2, ((0, 0), (0, pad)))                          # (1, 128) f32
    w3p = jnp.pad(w3.T, ((0, 0), (0, pad)))                        # (1, 128) f32 row
    return (w1p, b1p, w2p, b2p, w3p, b3)                           # b3: (1, 1) f32


def reference_forward(x, params):
    """Plain-JAX reference with the same bf16-matmul / f32-accumulate recipe."""
    w1, b1, w2, b2, w3, b3 = params
    h = jnp.dot(x.astype(jnp.bfloat16), w1.astype(jnp.bfloat16),
                preferred_element_type=jnp.float32)
    h = jnp.maximum(h + b1, 0.0)
    h = jnp.dot(h.astype(jnp.bfloat16), w2.astype(jnp.bfloat16),
                preferred_element_type=jnp.float32)
    h = jnp.maximum(h + b2, 0.0)
    return jnp.sum(h * w3.T, axis=-1, keepdims=True) + b3


if __name__ == "__main__":
    key = jax.random.PRNGKey(0)
    k_x, k_p = jax.random.split(key)

    batch, input_size = 8, 16
    x = jax.random.normal(k_x, (batch, input_size), jnp.float32)
    params = init_params(k_p, input_size)
    kernel_params = prepare_kernel_params(params)

    out = quantile_net_forward(x, kernel_params)
    out = jax.block_until_ready(out)

    ref = reference_forward(x, params)
    assert out.shape == (batch, 1)
    assert jnp.allclose(out, ref, atol=1e-3, rtol=1e-3), (
        float(jnp.max(jnp.abs(out - ref))))

    print("KERNEL_OK")
</pallas_src>

<mosaic_0001>
module attributes {stable_mosaic.version = 11 : i64} {
  func.func @quantile_net_kernel(%arg0: i32, %arg1: memref<8x16xbf16, #tpu.memory_space<vmem>>, %arg2: memref<16x128xbf16, #tpu.memory_space<vmem>>, %arg3: memref<1x128xf32, #tpu.memory_space<vmem>>, %arg4: memref<128x128xbf16, #tpu.memory_space<vmem>>, %arg5: memref<1x128xf32, #tpu.memory_space<vmem>>, %arg6: memref<1x128xf32, #tpu.memory_space<vmem>>, %arg7: memref<1x1xf32, #tpu.memory_space<vmem>>, %arg8: memref<8x128xf32, #tpu.memory_space<vmem>>) attributes {dimension_semantics = [#tpu.dimension_semantics<parallel>], iteration_bounds = array<i64: 1>, scalar_prefetch = 0 : i64, scratch_operands = 0 : i64, tpu.core_type = #tpu.core_type<tc>, window_params = [{transform_indices = @transform_0, window_bounds = array<i64: 8, 16>}, {pipeline_mode = #tpu.pipeline_mode<synchronous>, transform_indices = @transform_1, window_bounds = array<i64: 16, 128>}, {pipeline_mode = #tpu.pipeline_mode<synchronous>, transform_indices = @transform_2, window_bounds = array<i64: 1, 128>}, {pipeline_mode = #tpu.pipeline_mode<synchronous>, transform_indices = @transform_3, window_bounds = array<i64: 128, 128>}, {pipeline_mode = #tpu.pipeline_mode<synchronous>, transform_indices = @transform_4, window_bounds = array<i64: 1, 128>}, {pipeline_mode = #tpu.pipeline_mode<synchronous>, transform_indices = @transform_5, window_bounds = array<i64: 1, 128>}, {pipeline_mode = #tpu.pipeline_mode<synchronous>, transform_indices = @transform_6, window_bounds = array<i64: 1, 1>}, {transform_indices = @transform_7, window_bounds = array<i64: 8, 128>}]} {
    %c0 = arith.constant 0 : index
    %c0_0 = arith.constant 0 : index
    %0 = vector.load %arg1[%c0, %c0_0] : memref<8x16xbf16, #tpu.memory_space<vmem>>, vector<8x16xbf16>
    %c0_1 = arith.constant 0 : index
    %c0_2 = arith.constant 0 : index
    %1 = vector.load %arg2[%c0_1, %c0_2] : memref<16x128xbf16, #tpu.memory_space<vmem>>, vector<16x128xbf16>
    %cst = arith.constant dense<0.000000e+00> : vector<8x128xf32>
    %2 = tpu.matmul %0, %1, %cst {dimension_numbers = #tpu.dot_dimension_numbers<[1], [0], [0], [1], [0, 0, 1, 1], [], []>} : vector<8x16xbf16>, vector<16x128xbf16>, vector<8x128xf32> -> vector<8x128xf32>
    %c0_3 = arith.constant 0 : index
    %c0_4 = arith.constant 0 : index
    %3 = vector.load %arg3[%c0_3, %c0_4] : memref<1x128xf32, #tpu.memory_space<vmem>>, vector<1x128xf32>
    %4 = vector.broadcast %3 : vector<1x128xf32> to vector<8x128xf32>
    %5 = arith.addf %2, %4 : vector<8x128xf32>
    %cst_5 = arith.constant 0.000000e+00 : f32
    %6 = vector.broadcast %cst_5 : f32 to vector<8x128xf32>
    %7 = arith.maximumf %5, %6 : vector<8x128xf32>
    %8 = arith.truncf %7 : vector<8x128xf32> to vector<8x128xbf16>
    %c0_6 = arith.constant 0 : index
    %c0_7 = arith.constant 0 : index
    %9 = vector.load %arg4[%c0_6, %c0_7] : memref<128x128xbf16, #tpu.memory_space<vmem>>, vector<128x128xbf16>
    %cst_8 = arith.constant dense<0.000000e+00> : vector<8x128xf32>
    %10 = tpu.matmul %8, %9, %cst_8 {dimension_numbers = #tpu.dot_dimension_numbers<[1], [0], [0], [1], [0, 0, 1, 1], [], []>} : vector<8x128xbf16>, vector<128x128xbf16>, vector<8x128xf32> -> vector<8x128xf32>
    %c0_9 = arith.constant 0 : index
    %c0_10 = arith.constant 0 : index
    %11 = vector.load %arg5[%c0_9, %c0_10] : memref<1x128xf32, #tpu.memory_space<vmem>>, vector<1x128xf32>
    %12 = vector.broadcast %11 : vector<1x128xf32> to vector<8x128xf32>
    %13 = arith.addf %10, %12 : vector<8x128xf32>
    %cst_11 = arith.constant 0.000000e+00 : f32
    %14 = vector.broadcast %cst_11 : f32 to vector<8x128xf32>
    %15 = arith.maximumf %13, %14 : vector<8x128xf32>
    %c0_12 = arith.constant 0 : index
    %c0_13 = arith.constant 0 : index
    %16 = vector.load %arg6[%c0_12, %c0_13] : memref<1x128xf32, #tpu.memory_space<vmem>>, vector<1x128xf32>
    %17 = vector.broadcast %16 : vector<1x128xf32> to vector<8x128xf32>
    %18 = arith.mulf %15, %17 : vector<8x128xf32>
    %cst_14 = arith.constant dense<0.000000e+00> : vector<8xf32>
    %19 = vector.multi_reduction <add>, %18, %cst_14 [1] : vector<8x128xf32> to vector<8xf32>
    %20 = vector.shape_cast %19 : vector<8xf32> to vector<8x1xf32>
    %c0_15 = arith.constant 0 : index
    %c0_16 = arith.constant 0 : index
    %21 = vector.load %arg7[%c0_15, %c0_16] : memref<1x1xf32, #tpu.memory_space<vmem>>, vector<1x1xf32>
    %22 = vector.broadcast %21 : vector<1x1xf32> to vector<8x1xf32>
    %23 = arith.addf %20, %22 : vector<8x1xf32>
    %24 = vector.shape_cast %23 : vector<8x1xf32> to vector<8x1xf32>
    %25 = vector.broadcast %24 : vector<8x1xf32> to vector<8x128xf32>
    %c0_17 = arith.constant 0 : index
    %c0_18 = arith.constant 0 : index
    %26 = vector.load %arg8[%c0_17, %c0_18] : memref<8x128xf32, #tpu.memory_space<vmem>>, vector<8x128xf32>
    tpu.vector_store %arg8[%c0_17, %c0_18], %25 {strides = array<i32>} : memref<8x128xf32, #tpu.memory_space<vmem>>, vector<8x128xf32>,
    return
  }
  func.func @transform_0(%arg0: i32) -> (i32, i32) {
    %c0_i32 = arith.constant 0 : i32
    %c0_i32_0 = arith.constant 0 : i32
    return %arg0, %c0_i32 : i32, i32
  }
  func.func @transform_1(%arg0: i32) -> (i32, i32) {
    %c0_i32 = arith.constant 0 : i32
    %c0_i32_0 = arith.constant 0 : i32
    %c0_i32_1 = arith.constant 0 : i32
    return %c0_i32, %c0_i32_0 : i32, i32
  }
  func.func @transform_2(%arg0: i32) -> (i32, i32) {
    %c0_i32 = arith.constant 0 : i32
    %c0_i32_0 = arith.constant 0 : i32
    %c0_i32_1 = arith.constant 0 : i32
    return %c0_i32, %c0_i32_0 : i32, i32
  }
  func.func @transform_3(%arg0: i32) -> (i32, i32) {
    %c0_i32 = arith.constant 0 : i32
    %c0_i32_0 = arith.constant 0 : i32
    %c0_i32_1 = arith.constant 0 : i32
    return %c0_i32, %c0_i32_0 : i32, i32
  }
  func.func @transform_4(%arg0: i32) -> (i32, i32) {
    %c0_i32 = arith.constant 0 : i32
    %c0_i32_0 = arith.constant 0 : i32
    %c0_i32_1 = arith.constant 0 : i32
    return %c0_i32, %c0_i32_0 : i32, i32
  }
  func.func @transform_5(%arg0: i32) -> (i32, i32) {
    %c0_i32 = arith.constant 0 : i32
    %c0_i32_0 = arith.constant 0 : i32
    %c0_i32_1 = arith.constant 0 : i32
    return %c0_i32, %c0_i32_0 : i32, i32
  }
  func.func @transform_6(%arg0: i32) -> (i32, i32) {
    %c0_i32 = arith.constant 0 : i32
    %c0_i32_0 = arith.constant 0 : i32
    %c0_i32_1 = arith.constant 0 : i32
    return %c0_i32, %c0_i32_0 : i32, i32
  }
  func.func @transform_7(%arg0: i32) -> (i32, i32) {
    %c0_i32 = arith.constant 0 : i32
    %c0_i32_0 = arith.constant 0 : i32
    return %arg0, %c0_i32 : i32, i32
  }
}

</mosaic_0001>

<llo_original>
// kernel: quantile_net_forward.1
$region0: #{quantile_net_forward.1}
  #allocation0 [shape = 'u32[]', space=smem, size = 0x4, offset = 0x4, fixed_abs, tag = 'smem constant byte address 0x4 - core index']
  #allocation1 [shape = 'u32[72,128]{1,0:T(1,128)}', space=vmem, size = 0x9000, scoped, tag = 'internal scratch']
  #allocation2 [shape = 'f32[1,1]{1,0:T(1,128)S(1)}', space=vmem, size = 0x200, scoped, tag = 'scoped memory for quantile_net_forward.1']
  %s0 = inlined_call_operand.vmem [shape: bf16[8,16], index: 0, kind: input, shape index: {}]
  %s1 = inlined_call_operand.vmem [shape: bf16[16,128], index: 1, kind: input, shape index: {}]
  %s2 = inlined_call_operand.vmem [shape: f32[1,128], index: 2, kind: input, shape index: {}]
  %s3 = inlined_call_operand.hbm [shape: bf16[128,128], index: 3, kind: input, shape index: {}]
  %s4 = inlined_call_operand.vmem [shape: f32[1,128], index: 4, kind: input, shape index: {}]
  %s5 = inlined_call_operand.vmem [shape: f32[1,128], index: 5, kind: input, shape index: {}]
  %s6 = inlined_call_operand.<no memory space> [shape: f32[1,1], index: 6, kind: input, shape index: {}]
  %s7 = inlined_call_operand.vmem [shape: f32[8,128], index: 7, kind: output, shape index: {}]
  %s8 = sld [smem:[#allocation0]]
  $region42: #{quantile_net_forward.1} parent=0
    _
  %s10 = ssub.s32 1, %s8
  %s11 = scalar_select 0, %s10, %s8
  %v12 = vstv %s6
  %13 = vst [vmem:[#allocation2] sm:$0x1] %v12
  $region1: #{quantile_net_forward.1} parent=0
    #allocation3 [shape = 'u8[32768]{0}', space=vmem, size = 0x8000, scoped, tag = 'input window, operand 3, single buffered']
    #allocation4 [shape = 's32[1]{0}', space=sflag, size = 0x4, scoped, tag = 'scoped memory for quantile_net_forward.1']
    %14 = vsyncpa [#allocation4], 0
    // Predicated region
    $region2: #{quantile_net_forward.1} parent=1 // pred_check
      _
    $region3: #{quantile_net_forward.1} parent=1 // pred_check_branch
      %16 = sbr.rel (0) target = $region5
    $region4: #{quantile_net_forward.1} parent=1 // pred_region
      _
    $region5: #{quantile_net_forward.1} parent=1 // pred_fallthru
      _
    // Predicated region
    $region6: #{quantile_net_forward.1} parent=1 // pred_check
      _
    $region7: #{quantile_net_forward.1} parent=1 // pred_check_branch
      %18 = sbr.rel (0) target = $region9
    $region8: #{quantile_net_forward.1} parent=1 // pred_region
      _
    $region9: #{quantile_net_forward.1} parent=1 // pred_fallthru
      _
    // Predicated region
    $region10: #{quantile_net_forward.1} parent=1 // pred_check
      _
    $region11: #{quantile_net_forward.1} parent=1 // pred_check_branch
      %20 = sbr.rel (0) target = $region13
    $region12: #{quantile_net_forward.1} parent=1 // pred_region
      _
    $region13: #{quantile_net_forward.1} parent=1 // pred_fallthru
      _
    // Predicated region
    $region14: #{quantile_net_forward.1} parent=1 // pred_check
      _
    $region15: #{quantile_net_forward.1} parent=1 // pred_check_branch
      %22 = sbr.rel (0) target = $region17
    $region16: #{quantile_net_forward.1} parent=1 // pred_region
      %24 = vsyncadd [#allocation4], 0
      %s25 = sshll.u32 %s3, 4
      %s26 = int_to_ptr.hbm [resolvable:$true] %s25
      %s27 = sshll.u32 [#allocation3], 4
      %s28 = int_to_ptr.vmem [resolvable:$true] %s27
      %33 = dma.hbm_to_vmem [thread:$0]  %s26, 1024, %s28, [#allocation4], 64, 64, 4
    $region17: #{quantile_net_forward.1} parent=1 // pred_fallthru
      _
    // Predicated region
    $region18: #{quantile_net_forward.1} parent=1 // pred_check
      _
    $region19: #{quantile_net_forward.1} parent=1 // pred_check_branch
      %35 = sbr.rel (0) target = $region21
    $region20: #{quantile_net_forward.1} parent=1 // pred_region
      _
    $region21: #{quantile_net_forward.1} parent=1 // pred_fallthru
      _
    // Predicated region
    $region22: #{quantile_net_forward.1} parent=1 // pred_check
      _
    $region23: #{quantile_net_forward.1} parent=1 // pred_check_branch
      %37 = sbr.rel (0) target = $region25
    $region24: #{quantile_net_forward.1} parent=1 // pred_region
      _
    $region25: #{quantile_net_forward.1} parent=1 // pred_fallthru
      _
    // Predicated region
    $region26: #{quantile_net_forward.1} parent=1 // pred_check
      _
    $region27: #{quantile_net_forward.1} parent=1 // pred_check_branch
      %39 = sbr.rel (0) target = $region29
    $region28: #{quantile_net_forward.1} parent=1 // pred_region
      _
    $region29: #{quantile_net_forward.1} parent=1 // pred_fallthru
      _
    // Predicated region
    $region30: #{quantile_net_forward.1} parent=1 // pred_check
      _
    $region31: #{quantile_net_forward.1} parent=1 // pred_check_branch
      %41 = sbr.rel (0) target = $region33
    $region32: #{quantile_net_forward.1} parent=1 // pred_region
      %43 = dma.done [#allocation4], 1024
    $region33: #{quantile_net_forward.1} parent=1 // pred_fallthru
      _
    %v45 = vld [vmem:[%s0] sm:$0xf]
    %v46 = vld [vmem:[%s1] sm:$0xf]
    %v47 = vld [vmem:[%s1 + $0x4] sm:$0xf]
    %v48 = vld [vmem:[%s2] sm:$0x1]
    %v50 = vperm.slane %v48, 0
    %v54 = vunpack.c.l.b16 %v46
    %v55 = vunpack.c.l.b16 %v47
    %v56 = vpack.c.b16 %v55, %v54
    %vm58 = vcmask 130048
    %v60 = vsel %vm58, %v45, 0
    %62 = vmatpush.bf16.msra.mxu0 0
    %63 = vmatpush.bf16.msra.mxu0 0
    %64 = vmatpush.bf16.msra.mxu0 0
    %65 = vmatpush.bf16.msra.mxu0 0
    %66 = vmatpush.bf16.msra.mxu0 0
    %67 = vmatpush.bf16.msra.mxu0 0
    %68 = vmatpush.bf16.msra.mxu0 0
    %69 = vmatpush.bf16.msra.mxu0 %v56
    %70 = vmatmul.bf16.gmra.mxu0 %v60
    %v71 = vpop.f32.mrf.mxu0
    %v72 = vadd.f32 %v50, %v71
    %v73 = vpop.f32.mrf.mxu0
    %74 = vdwg.mxu0
    %v75 = vmax.f32 %v72, 0.0
    %v76 = vpack.c.bf16 %v75, %v75
    %v77 = vld [vmem:[#allocation3] sm:$0xf]
    %v78 = vld [vmem:[#allocation3 + $0x4] sm:$0xf]
    %v79 = vld [vmem:[#allocation3 + $0x8] sm:$0xf]
    %v80 = vld [vmem:[#allocation3 + $0xc] sm:$0xf]
    %v81 = vld [vmem:[#allocation3 + $0x10] sm:$0xf]
    %v82 = vld [vmem:[#allocation3 + $0x14] sm:$0xf]
    %v83 = vld [vmem:[#allocation3 + $0x18] sm:$0xf]
    %v84 = vld [vmem:[#allocation3 + $0x1c] sm:$0xf]
    %v85 = vld [vmem:[#allocation3 + $0x20] sm:$0xf]
    %v86 = vld [vmem:[#allocation3 + $0x24] sm:$0xf]
    %v87 = vld [vmem:[#allocation3 + $0x28] sm:$0xf]
    %v88 = vld [vmem:[#allocation3 + $0x2c] sm:$0xf]
    %v89 = vld [vmem:[#allocation3 + $0x30] sm:$0xf]
    %v90 = vld [vmem:[#allocation3 + $0x34] sm:$0xf]
    %v91 = vld [vmem:[#allocation3 + $0x38] sm:$0xf]
    %v92 = vld [vmem:[#allocation3 + $0x3c] sm:$0xf]
    %v93 = vld [vmem:[%s4] sm:$0x1]
    %v95 = vperm.slane %v93, 0
    %v113 = vunpack.c.l.b16 %v77
    %v114 = vunpack.c.l.b16 %v78
    %v115 = vunpack.c.l.b16 %v79
    %v116 = vunpack.c.l.b16 %v80
    %v117 = vunpack.c.l.b16 %v81
    %v118 = vunpack.c.l.b16 %v82
    %v119 = vunpack.c.l.b16 %v83
    %v120 = vunpack.c.l.b16 %v84
    %v121 = vunpack.c.l.b16 %v85
    %v122 = vunpack.c.l.b16 %v86
    %v123 = vunpack.c.l.b16 %v87
    %v124 = vunpack.c.l.b16 %v88
    %v125 = vunpack.c.l.b16 %v89
    %v126 = vunpack.c.l.b16 %v90
    %v127 = vunpack.c.l.b16 %v91
    %v128 = vunpack.c.l.b16 %v92
    %v129 = vpack.c.b16 %v114, %v113
    %v130 = vpack.c.b16 %v116, %v115
    %v131 = vpack.c.b16 %v118, %v117
    %v132 = vpack.c.b16 %v120, %v119
    %v133 = vpack.c.b16 %v122, %v121
    %v134 = vpack.c.b16 %v124, %v123
    %v135 = vpack.c.b16 %v126, %v125
    %v136 = vpack.c.b16 %v128, %v127
    %145 = vmatpush.bf16.msra.mxu0 %v136
    %146 = vmatpush.bf16.msra.mxu0 %v135
    %147 = vmatpush.bf16.msra.mxu0 %v134
    %148 = vmatpush.bf16.msra.mxu0 %v133
    %149 = vmatpush.bf16.msra.mxu0 %v132
    %150 = vmatpush.bf16.msra.mxu0 %v131
    %151 = vmatpush.bf16.msra.mxu0 %v130
    %152 = vmatpush.bf16.msra.mxu0 %v129
    %153 = vmatmul.bf16.gmra.mxu0 %v76
    %v154 = vpop.f32.mrf.mxu0
    %v155 = vadd.f32 %v95, %v154
    %v156 = vpop.f32.mrf.mxu0
    %157 = vdwg.mxu0
    %v158 = vmax.f32 %v155, 0.0
    %v159 = vld [vmem:[%s5] sm:$0x1]
    %v161 = vperm.slane %v159, 0
    %v163 = vmul.f32 %v158, %v161
    %164 = vadd.xlane.f32.xlu0 %v163
    %v165 = vpop.xlane.xlu0 %164
    %v166 = vld [vmem:[#allocation2] sm:$0x1]
    %v168 = vperm.slane %v166, 0
    %v170 = vadd.f32 %v165, %v168
    %172 = vset.pattern.permute.xlu0 0
    %173 = vperm.xlu0 %172, %v170
    %v174 = vpop.permute.xlu0 %173
    %176 = vst [vmem:[%s7] sm:$0xff] %v174
    // Predicated region
    $region34: #{quantile_net_forward.1} parent=1 // pred_check
      _
    $region35: #{quantile_net_forward.1} parent=1 // pred_check_branch
      %178 = sbr.rel (0) target = $region37
    $region36: #{quantile_net_forward.1} parent=1 // pred_region
      _
    $region37: #{quantile_net_forward.1} parent=1 // pred_fallthru
      _
    // Predicated region
    $region38: #{quantile_net_forward.1} parent=1 // pred_check
      _
    $region39: #{quantile_net_forward.1} parent=1 // pred_check_branch
      %180 = sbr.rel (0) target = $region41
    $region40: #{quantile_net_forward.1} parent=1 // pred_region
      _
    $region41: #{quantile_net_forward.1} parent=1 // pred_fallthru
      _
    %181 = vsyncpa [#allocation4], 1

</llo_original>
